<compile_context>
chip_gen: v5e
topology: v5e:2x2
jax: 0.10.0
libtpu: 0.0.40
codegen_flags: <defaults>
</compile_context>

<pallas_src>
import jax
import jax.numpy as jnp
import numpy as np
from jax.experimental import pallas as pl
from jax.experimental.pallas import tpu as pltpu

INPUT_DIM = 6
HIDDEN = 32
N_BRANCH = 4
FUSE_HIDDEN = 16
HEAD_DIM = FUSE_HIDDEN + N_BRANCH   # 20: [fusion-hidden pre-act | branch outputs]
OUT_ROWS = 8                        # output sublanes: 0..3 parts, 4 total, 5..7 pad
DEFAULT_MAX_TILE_B = 4096           # lane-dense tiles are tiny; fits all generations


def _round_up(a, m):
    return ((a + m - 1) // m) * m


def _full_model_kernel(xt_ref, w1t_ref, b1t_ref, wht_ref, bht_ref, wf2t_ref, bf2_ref,
                       out_ref):
    xt = xt_ref[...]                                                     # (6, tb)

    # --- 4 branch first layers fused: relu(W1^T @ x^T + b1^T) -> (128, tb) ---
    h = jnp.dot(w1t_ref[...], xt, preferred_element_type=jnp.float32) + b1t_ref[...]
    h = jnp.maximum(h, 0.0)                                              # (128, tb)

    # --- fused head: rows 0..15 fusion-hidden pre-act, rows 16..19 parts ---
    hp = jnp.dot(wht_ref[...], h, preferred_element_type=jnp.float32) + bht_ref[...]
    hf = jnp.maximum(hp[:FUSE_HIDDEN, :], 0.0)                           # (16, tb)
    parts_t = hp[FUSE_HIDDEN:FUSE_HIDDEN + N_BRANCH, :]                  # (4, tb)

    # --- fusion output layer: Wf2^T @ hf -> (1, tb) ---
    total_t = (jnp.dot(wf2t_ref[...], hf, preferred_element_type=jnp.float32)
               + bf2_ref[...])                                           # (1, tb)

    # --- direct lane-dense stores into the (8, tb) output block ---
    out_ref[0:N_BRANCH, :] = parts_t
    out_ref[N_BRANCH:N_BRANCH + 1, :] = total_t
    out_ref[N_BRANCH + 1:OUT_ROWS, :] = jnp.zeros(
        (OUT_ROWS - N_BRANCH - 1, out_ref.shape[1]), dtype=out_ref.dtype)


def full_model_forward(x, params, *, tile_b=None):
    """x: (B, 6) float32. Returns (p_parts (B,4), p_total (B,1)) like FullModel."""
    B = x.shape[0]
    if tile_b is None:
        # Aim for >=2 grid steps when B is large enough (v7x 2-TC megacore),
        # while keeping the tile a multiple of 128 lanes and capped for VMEM.
        tile_b = min(DEFAULT_MAX_TILE_B, _round_up(-(-B // 2), 128))
    tile_b = max(128, _round_up(int(tile_b), 128))     # lane-dense: multiple of 128

    Bp = _round_up(B, tile_b)
    xt = jnp.asarray(x, jnp.float32).T                 # (6, B): batch on lanes
    if Bp != B:
        xt = jnp.pad(xt, ((0, 0), (0, Bp - B)))

    w1t, b1t = params["w1_t"], params["b1_t"]          # (128, 6), (128, 1)
    wht, bht = params["w_head_t"], params["b_head_t"]  # (20, 128), (20, 1)
    wf2t, bf2 = params["wf2_t"], params["bf2"]         # (1, 16),  (1, 1)

    grid = (Bp // tile_b,)
    const = lambda i: (0, 0)   # weights: same (only) block every step -> fetched once

    out = pl.pallas_call(
        _full_model_kernel,
        out_shape=jax.ShapeDtypeStruct((OUT_ROWS, Bp), jnp.float32),
        grid_spec=pltpu.PrefetchScalarGridSpec(
            num_scalar_prefetch=0,
            grid=grid,
            in_specs=[
                pl.BlockSpec((INPUT_DIM, tile_b), lambda i: (0, i)),   # x^T tile
                pl.BlockSpec(w1t.shape, const),
                pl.BlockSpec(b1t.shape, const),
                pl.BlockSpec(wht.shape, const),
                pl.BlockSpec(bht.shape, const),
                pl.BlockSpec(wf2t.shape, const),
                pl.BlockSpec(bf2.shape, const),
            ],
            out_specs=pl.BlockSpec((OUT_ROWS, tile_b), lambda i: (0, i)),
        ),
        compiler_params=pltpu.CompilerParams(
            dimension_semantics=("parallel",)),        # batch axis shards across TCs
    )(xt, w1t, b1t, wht, bht, wf2t, bf2)

    parts = out[:N_BRANCH, :B].T                       # (B, 4)
    total = out[N_BRANCH:N_BRANCH + 1, :B].T           # (B, 1)
    return parts, total


def init_params(key):
    """Deterministic synthetic parameters matching FullModel's shapes, pre-packed."""
    ks = jax.random.split(key, 16)

    # Per-branch weights: Linear(6,32) and Linear(32,1), 4 branches.
    w1_branches = [jax.random.normal(ks[i], (INPUT_DIM, HIDDEN), jnp.float32) * 0.3
                   for i in range(4)]
    b1_branches = [jax.random.normal(ks[4 + i], (HIDDEN,), jnp.float32) * 0.1
                   for i in range(4)]
    w2_branches = [jax.random.normal(ks[8 + i], (HIDDEN, 1), jnp.float32) * 0.3
                   for i in range(4)]
    b2 = (jnp.arange(4, dtype=jnp.float32) * 0.01)[None, :]           # (1, 4)

    # Pack: first layers side-by-side, second layers block-diagonal.
    w1 = jnp.concatenate(w1_branches, axis=1)                          # (6, 128)
    b1 = jnp.concatenate(b1_branches, axis=0)[None, :]                 # (1, 128)
    w2_blk = np.zeros((N_BRANCH * HIDDEN, N_BRANCH), dtype=np.float32)
    for i in range(N_BRANCH):
        w2_blk[i * HIDDEN:(i + 1) * HIDDEN, i] = np.asarray(w2_branches[i][:, 0])
    w2 = jnp.asarray(w2_blk)                                           # (128, 4)

    # Fusion net: Linear(4,16) + ReLU + Linear(16,1).
    wf1 = jax.random.normal(ks[12], (N_BRANCH, FUSE_HIDDEN), jnp.float32) * 0.3
    bf1 = jax.random.normal(ks[13], (FUSE_HIDDEN,), jnp.float32)[None, :] * 0.1
    wf2 = jax.random.normal(ks[14], (FUSE_HIDDEN, 1), jnp.float32) * 0.3
    bf2 = jax.random.normal(ks[15], (1,), jnp.float32)[None, :] * 0.1  # (1, 1)

    # Fused head, fusion-hidden FIRST (sublane-0-aligned operand for matmul #3):
    #   hp = h @ [W2@Wf1 | W2] + [b2@Wf1 + bf1 | b2]
    w_head = jnp.concatenate([w2 @ wf1, w2], axis=1)                   # (128, 20)
    b_head = jnp.concatenate([b2 @ wf1 + bf1, b2], axis=1)             # (1, 20)

    return dict(
        # Original (PyTorch-semantics) packed weights, for the pure-JAX reference.
        w1=w1, b1=b1, w2=w2, b2=b2, wf1=wf1, bf1=bf1, wf2=wf2, bf2=bf2,
        # Transposed weights for the batch-on-lanes kernel.
        w1_t=w1.T, b1_t=b1.T,                                          # (128,6),(128,1)
        w_head_t=w_head.T, b_head_t=b_head.T,                          # (20,128),(20,1)
        wf2_t=wf2.T,                                                   # (1,16)
    )


def reference_forward(x, params):
    """Pure-JAX reference with the ORIGINAL (unfused) packed weights == PyTorch semantics."""
    h = jnp.maximum(x @ params["w1"] + params["b1"], 0.0)
    parts = h @ params["w2"] + params["b2"]
    hf = jnp.maximum(parts @ params["wf1"] + params["bf1"], 0.0)
    total = hf @ params["wf2"] + params["bf2"]
    return parts, total


if __name__ == "__main__":
    params = init_params(jax.random.PRNGKey(42))

    # Primary small-shape check (batch=8): single grid step, whole batch in one tile.
    batch = 8
    x = jax.random.normal(jax.random.PRNGKey(0), (batch, INPUT_DIM), dtype=jnp.float32)
    p_parts, p_total = full_model_forward(x, params)
    p_parts = jax.block_until_ready(p_parts)
    p_total = jax.block_until_ready(p_total)
    ref_parts, ref_total = reference_forward(x, params)
    assert p_parts.shape == (batch, N_BRANCH) and p_total.shape == (batch, 1)
    np.testing.assert_allclose(np.asarray(p_parts), np.asarray(ref_parts),
                               rtol=1e-4, atol=1e-4)
    np.testing.assert_allclose(np.asarray(p_total), np.asarray(ref_total),
                               rtol=1e-4, atol=1e-4)

    # Secondary check: non-multiple batch exercises padding + a multi-step grid
    # (B=300, tile_b=128 -> 3 grid steps).
    batch2 = 300
    x2 = jax.random.normal(jax.random.PRNGKey(1), (batch2, INPUT_DIM), dtype=jnp.float32)
    p2_parts, p2_total = full_model_forward(x2, params, tile_b=128)
    p2_parts = jax.block_until_ready(p2_parts)
    p2_total = jax.block_until_ready(p2_total)
    r2_parts, r2_total = reference_forward(x2, params)
    np.testing.assert_allclose(np.asarray(p2_parts), np.asarray(r2_parts),
                               rtol=1e-4, atol=1e-4)
    np.testing.assert_allclose(np.asarray(p2_total), np.asarray(r2_total),
                               rtol=1e-4, atol=1e-4)

    print("KERNEL_OK")
</pallas_src>

<mosaic_0001>
module attributes {stable_mosaic.version = 11 : i64} {
  func.func @_full_model_kernel(%arg0: i32, %arg1: memref<6x128xf32, #tpu.memory_space<vmem>>, %arg2: memref<128x6xf32, #tpu.memory_space<vmem>>, %arg3: memref<128x1xf32, #tpu.memory_space<vmem>>, %arg4: memref<20x128xf32, #tpu.memory_space<vmem>>, %arg5: memref<20x1xf32, #tpu.memory_space<vmem>>, %arg6: memref<1x16xf32, #tpu.memory_space<vmem>>, %arg7: memref<1x1xf32, #tpu.memory_space<vmem>>, %arg8: memref<8x128xf32, #tpu.memory_space<vmem>>) attributes {dimension_semantics = [#tpu.dimension_semantics<parallel>], iteration_bounds = array<i64: 1>, scalar_prefetch = 0 : i64, scratch_operands = 0 : i64, tpu.core_type = #tpu.core_type<tc>, window_params = [{transform_indices = @transform_0, window_bounds = array<i64: 6, 128>}, {pipeline_mode = #tpu.pipeline_mode<synchronous>, transform_indices = @transform_1, window_bounds = array<i64: 128, 6>}, {pipeline_mode = #tpu.pipeline_mode<synchronous>, transform_indices = @transform_2, window_bounds = array<i64: 128, 1>}, {pipeline_mode = #tpu.pipeline_mode<synchronous>, transform_indices = @transform_3, window_bounds = array<i64: 20, 128>}, {pipeline_mode = #tpu.pipeline_mode<synchronous>, transform_indices = @transform_4, window_bounds = array<i64: 20, 1>}, {pipeline_mode = #tpu.pipeline_mode<synchronous>, transform_indices = @transform_5, window_bounds = array<i64: 1, 16>}, {pipeline_mode = #tpu.pipeline_mode<synchronous>, transform_indices = @transform_6, window_bounds = array<i64: 1, 1>}, {transform_indices = @transform_7, window_bounds = array<i64: 8, 128>}]} {
    %c0 = arith.constant 0 : index
    %c0_0 = arith.constant 0 : index
    %0 = vector.load %arg1[%c0, %c0_0] : memref<6x128xf32, #tpu.memory_space<vmem>>, vector<6x128xf32>
    %c0_1 = arith.constant 0 : index
    %c0_2 = arith.constant 0 : index
    %1 = vector.load %arg2[%c0_1, %c0_2] : memref<128x6xf32, #tpu.memory_space<vmem>>, vector<128x6xf32>
    %cst = arith.constant dense<0.000000e+00> : vector<128x128xf32>
    %2 = tpu.matmul %1, %0, %cst {dimension_numbers = #tpu.dot_dimension_numbers<[1], [0], [0], [1], [0, 0, 1, 1], [], []>} : vector<128x6xf32>, vector<6x128xf32>, vector<128x128xf32> -> vector<128x128xf32>
    %c0_3 = arith.constant 0 : index
    %c0_4 = arith.constant 0 : index
    %3 = vector.load %arg3[%c0_3, %c0_4] : memref<128x1xf32, #tpu.memory_space<vmem>>, vector<128x1xf32>
    %4 = vector.broadcast %3 : vector<128x1xf32> to vector<128x128xf32>
    %5 = arith.addf %2, %4 : vector<128x128xf32>
    %cst_5 = arith.constant 0.000000e+00 : f32
    %6 = vector.broadcast %cst_5 : f32 to vector<128x128xf32>
    %7 = arith.maximumf %5, %6 : vector<128x128xf32>
    %c0_6 = arith.constant 0 : index
    %c0_7 = arith.constant 0 : index
    %8 = vector.load %arg4[%c0_6, %c0_7] : memref<20x128xf32, #tpu.memory_space<vmem>>, vector<20x128xf32>
    %cst_8 = arith.constant dense<0.000000e+00> : vector<20x128xf32>
    %9 = tpu.matmul %8, %7, %cst_8 {dimension_numbers = #tpu.dot_dimension_numbers<[1], [0], [0], [1], [0, 0, 1, 1], [], []>} : vector<20x128xf32>, vector<128x128xf32>, vector<20x128xf32> -> vector<20x128xf32>
    %c0_9 = arith.constant 0 : index
    %c0_10 = arith.constant 0 : index
    %10 = vector.load %arg5[%c0_9, %c0_10] : memref<20x1xf32, #tpu.memory_space<vmem>>, vector<20x1xf32>
    %11 = vector.broadcast %10 : vector<20x1xf32> to vector<20x128xf32>
    %12 = arith.addf %9, %11 : vector<20x128xf32>
    %13 = vector.extract_strided_slice %12 {offsets = [0, 0], sizes = [16, 128], strides = [1, 1]} : vector<20x128xf32> to vector<16x128xf32>
    %cst_11 = arith.constant 0.000000e+00 : f32
    %14 = vector.broadcast %cst_11 : f32 to vector<16x128xf32>
    %15 = arith.maximumf %13, %14 : vector<16x128xf32>
    %16 = vector.extract_strided_slice %12 {offsets = [16, 0], sizes = [4, 128], strides = [1, 1]} : vector<20x128xf32> to vector<4x128xf32>
    %c0_12 = arith.constant 0 : index
    %c0_13 = arith.constant 0 : index
    %17 = vector.load %arg6[%c0_12, %c0_13] : memref<1x16xf32, #tpu.memory_space<vmem>>, vector<1x16xf32>
    %cst_14 = arith.constant dense<0.000000e+00> : vector<1x128xf32>
    %18 = tpu.matmul %17, %15, %cst_14 {dimension_numbers = #tpu.dot_dimension_numbers<[1], [0], [0], [1], [0, 0, 1, 1], [], []>} : vector<1x16xf32>, vector<16x128xf32>, vector<1x128xf32> -> vector<1x128xf32>
    %c0_15 = arith.constant 0 : index
    %c0_16 = arith.constant 0 : index
    %19 = vector.load %arg7[%c0_15, %c0_16] : memref<1x1xf32, #tpu.memory_space<vmem>>, vector<1x1xf32>
    %20 = vector.broadcast %19 : vector<1x1xf32> to vector<1x128xf32>
    %21 = arith.addf %18, %20 : vector<1x128xf32>
    %c0_17 = arith.constant 0 : index
    %c0_18 = arith.constant 0 : index
    %22 = vector.load %arg8[%c0_17, %c0_18] : memref<8x128xf32, #tpu.memory_space<vmem>>, vector<4x128xf32>
    tpu.vector_store %arg8[%c0_17, %c0_18], %16 {strides = array<i32>} : memref<8x128xf32, #tpu.memory_space<vmem>>, vector<4x128xf32>,
    %c4 = arith.constant 4 : index
    %c0_19 = arith.constant 0 : index
    %23 = vector.load %arg8[%c4, %c0_19] : memref<8x128xf32, #tpu.memory_space<vmem>>, vector<1x128xf32>
    tpu.vector_store %arg8[%c4, %c0_19], %21 {strides = array<i32>} : memref<8x128xf32, #tpu.memory_space<vmem>>, vector<1x128xf32>,
    %cst_20 = arith.constant 0.000000e+00 : f32
    %24 = vector.broadcast %cst_20 : f32 to vector<3x128xf32>
    %c5 = arith.constant 5 : index
    %c0_21 = arith.constant 0 : index
    %25 = vector.load %arg8[%c5, %c0_21] : memref<8x128xf32, #tpu.memory_space<vmem>>, vector<3x128xf32>
    tpu.vector_store %arg8[%c5, %c0_21], %24 {strides = array<i32>} : memref<8x128xf32, #tpu.memory_space<vmem>>, vector<3x128xf32>,
    return
  }
  func.func @transform_0(%arg0: i32) -> (i32, i32) {
    %c0_i32 = arith.constant 0 : i32
    %c0_i32_0 = arith.constant 0 : i32
    return %c0_i32, %arg0 : i32, i32
  }
  func.func @transform_1(%arg0: i32) -> (i32, i32) {
    %c0_i32 = arith.constant 0 : i32
    %c0_i32_0 = arith.constant 0 : i32
    %c0_i32_1 = arith.constant 0 : i32
    return %c0_i32, %c0_i32_0 : i32, i32
  }
  func.func @transform_2(%arg0: i32) -> (i32, i32) {
    %c0_i32 = arith.constant 0 : i32
    %c0_i32_0 = arith.constant 0 : i32
    %c0_i32_1 = arith.constant 0 : i32
    return %c0_i32, %c0_i32_0 : i32, i32
  }
  func.func @transform_3(%arg0: i32) -> (i32, i32) {
    %c0_i32 = arith.constant 0 : i32
    %c0_i32_0 = arith.constant 0 : i32
    %c0_i32_1 = arith.constant 0 : i32
    return %c0_i32, %c0_i32_0 : i32, i32
  }
  func.func @transform_4(%arg0: i32) -> (i32, i32) {
    %c0_i32 = arith.constant 0 : i32
    %c0_i32_0 = arith.constant 0 : i32
    %c0_i32_1 = arith.constant 0 : i32
    return %c0_i32, %c0_i32_0 : i32, i32
  }
  func.func @transform_5(%arg0: i32) -> (i32, i32) {
    %c0_i32 = arith.constant 0 : i32
    %c0_i32_0 = arith.constant 0 : i32
    %c0_i32_1 = arith.constant 0 : i32
    return %c0_i32, %c0_i32_0 : i32, i32
  }
  func.func @transform_6(%arg0: i32) -> (i32, i32) {
    %c0_i32 = arith.constant 0 : i32
    %c0_i32_0 = arith.constant 0 : i32
    %c0_i32_1 = arith.constant 0 : i32
    return %c0_i32, %c0_i32_0 : i32, i32
  }
  func.func @transform_7(%arg0: i32) -> (i32, i32) {
    %c0_i32 = arith.constant 0 : i32
    %c0_i32_0 = arith.constant 0 : i32
    return %c0_i32, %arg0 : i32, i32
  }
}

</mosaic_0001>

<llo_original>
// kernel: tpu_custom_call.1
$region0: #{tpu_custom_call.1}
  #allocation0 [shape = 'u32[]', space=smem, size = 0x4, offset = 0x4, fixed_abs, tag = 'smem constant byte address 0x4 - core index']
  #allocation1 [shape = 'u32[72,128]{1,0:T(1,128)}', space=vmem, size = 0x9000, scoped, tag = 'internal scratch']
  #allocation2 [shape = 'f32[1,1]{1,0:T(1,128)S(1)}', space=vmem, size = 0x200, scoped, tag = 'scoped memory for tpu_custom_call.1']
  %s0 = inlined_call_operand.vmem [shape: f32[6,128], index: 0, kind: input, shape index: {}]
  %s1 = inlined_call_operand.vmem [shape: f32[128,6], index: 1, kind: input, shape index: {}]
  %s2 = inlined_call_operand.vmem [shape: f32[128,1], index: 2, kind: input, shape index: {}]
  %s3 = inlined_call_operand.vmem [shape: f32[20,128], index: 3, kind: input, shape index: {}]
  %s4 = inlined_call_operand.vmem [shape: f32[20,1], index: 4, kind: input, shape index: {}]
  %s5 = inlined_call_operand.vmem [shape: f32[1,16], index: 5, kind: input, shape index: {}]
  %s6 = inlined_call_operand.<no memory space> [shape: f32[1,1], index: 6, kind: input, shape index: {}]
  %s7 = inlined_call_operand.hbm [shape: f32[8,128], index: 7, kind: output, shape index: {}]
  %s8 = sld [smem:[#allocation0]]
  $region38: #{tpu_custom_call.1} parent=0
    _
  %s10 = ssub.s32 1, %s8
  %s11 = scalar_select 0, %s10, %s8
  %v12 = vstv %s6
  %13 = vst [vmem:[#allocation2] sm:$0x1] %v12
  $region1: #{tpu_custom_call.1} parent=0
    #allocation3 [shape = 'u8[4096]{0}', space=vmem, size = 0x1000, scoped, tag = 'output window, operand 0, single buffered']
    #allocation4 [shape = 's32[1]{0}', space=sflag, size = 0x4, scoped, tag = 'scoped memory for tpu_custom_call.1']
    %14 = vsyncpa [#allocation4], 0
    // Predicated region
    $region2: #{tpu_custom_call.1} parent=1 // pred_check
      _
    $region3: #{tpu_custom_call.1} parent=1 // pred_check_branch
      %16 = sbr.rel (0) target = $region5
    $region4: #{tpu_custom_call.1} parent=1 // pred_region
      _
    $region5: #{tpu_custom_call.1} parent=1 // pred_fallthru
      _
    // Predicated region
    $region6: #{tpu_custom_call.1} parent=1 // pred_check
      _
    $region7: #{tpu_custom_call.1} parent=1 // pred_check_branch
      %18 = sbr.rel (0) target = $region9
    $region8: #{tpu_custom_call.1} parent=1 // pred_region
      _
    $region9: #{tpu_custom_call.1} parent=1 // pred_fallthru
      _
    // Predicated region
    $region10: #{tpu_custom_call.1} parent=1 // pred_check
      _
    $region11: #{tpu_custom_call.1} parent=1 // pred_check_branch
      %20 = sbr.rel (0) target = $region13
    $region12: #{tpu_custom_call.1} parent=1 // pred_region
      _
    $region13: #{tpu_custom_call.1} parent=1 // pred_fallthru
      _
    // Predicated region
    $region14: #{tpu_custom_call.1} parent=1 // pred_check
      _
    $region15: #{tpu_custom_call.1} parent=1 // pred_check_branch
      %22 = sbr.rel (0) target = $region17
    $region16: #{tpu_custom_call.1} parent=1 // pred_region
      _
    $region17: #{tpu_custom_call.1} parent=1 // pred_fallthru
      _
    // Predicated region
    $region18: #{tpu_custom_call.1} parent=1 // pred_check
      _
    $region19: #{tpu_custom_call.1} parent=1 // pred_check_branch
      %24 = sbr.rel (0) target = $region21
    $region20: #{tpu_custom_call.1} parent=1 // pred_region
      _
    $region21: #{tpu_custom_call.1} parent=1 // pred_fallthru
      _
    // Predicated region
    $region22: #{tpu_custom_call.1} parent=1 // pred_check
      _
    $region23: #{tpu_custom_call.1} parent=1 // pred_check_branch
      %26 = sbr.rel (0) target = $region25
    $region24: #{tpu_custom_call.1} parent=1 // pred_region
      _
    $region25: #{tpu_custom_call.1} parent=1 // pred_fallthru
      _
    // Predicated region
    $region26: #{tpu_custom_call.1} parent=1 // pred_check
      _
    $region27: #{tpu_custom_call.1} parent=1 // pred_check_branch
      %28 = sbr.rel (0) target = $region29
    $region28: #{tpu_custom_call.1} parent=1 // pred_region
      _
    $region29: #{tpu_custom_call.1} parent=1 // pred_fallthru
      _
    %v29 = vld [vmem:[%s0] sm:$0x3f]
    %v30 = vld [vmem:[%s1] sm:$0xff]
    %v31 = vld [vmem:[%s1 + $0x8] sm:$0xff]
    %v32 = vld [vmem:[%s1 + $0x10] sm:$0xff]
    %v33 = vld [vmem:[%s1 + $0x18] sm:$0xff]
    %v34 = vld [vmem:[%s1 + $0x20] sm:$0xff]
    %v35 = vld [vmem:[%s1 + $0x28] sm:$0xff]
    %v36 = vld [vmem:[%s1 + $0x30] sm:$0xff]
    %v37 = vld [vmem:[%s1 + $0x38] sm:$0xff]
    %v38 = vld [vmem:[%s1 + $0x40] sm:$0xff]
    %v39 = vld [vmem:[%s1 + $0x48] sm:$0xff]
    %v40 = vld [vmem:[%s1 + $0x50] sm:$0xff]
    %v41 = vld [vmem:[%s1 + $0x58] sm:$0xff]
    %v42 = vld [vmem:[%s1 + $0x60] sm:$0xff]
    %v43 = vld [vmem:[%s1 + $0x68] sm:$0xff]
    %v44 = vld [vmem:[%s1 + $0x70] sm:$0xff]
    %v45 = vld [vmem:[%s1 + $0x78] sm:$0xff]
    %v46 = vld [vmem:[%s2] sm:$0xff]
    %v47 = vld [vmem:[%s2 + $0x8] sm:$0xff]
    %v48 = vld [vmem:[%s2 + $0x10] sm:$0xff]
    %v49 = vld [vmem:[%s2 + $0x18] sm:$0xff]
    %v50 = vld [vmem:[%s2 + $0x20] sm:$0xff]
    %v51 = vld [vmem:[%s2 + $0x28] sm:$0xff]
    %v52 = vld [vmem:[%s2 + $0x30] sm:$0xff]
    %v53 = vld [vmem:[%s2 + $0x38] sm:$0xff]
    %v54 = vld [vmem:[%s2 + $0x40] sm:$0xff]
    %v55 = vld [vmem:[%s2 + $0x48] sm:$0xff]
    %v56 = vld [vmem:[%s2 + $0x50] sm:$0xff]
    %v57 = vld [vmem:[%s2 + $0x58] sm:$0xff]
    %v58 = vld [vmem:[%s2 + $0x60] sm:$0xff]
    %v59 = vld [vmem:[%s2 + $0x68] sm:$0xff]
    %v60 = vld [vmem:[%s2 + $0x70] sm:$0xff]
    %v61 = vld [vmem:[%s2 + $0x78] sm:$0xff]
    %63 = vset.pattern.permute.xlu0 0
    %64 = vperm.xlu0 %63, %v46
    %v65 = vpop.permute.xlu0 %64
    %68 = vset.pattern.permute.xlu0 0
    %69 = vperm.xlu0 %68, %v47
    %v70 = vpop.permute.xlu0 %69
    %73 = vset.pattern.permute.xlu0 0
    %74 = vperm.xlu0 %73, %v48
    %v75 = vpop.permute.xlu0 %74
    %78 = vset.pattern.permute.xlu0 0
    %79 = vperm.xlu0 %78, %v49
    %v80 = vpop.permute.xlu0 %79
    %83 = vset.pattern.permute.xlu0 0
    %84 = vperm.xlu0 %83, %v50
    %v85 = vpop.permute.xlu0 %84
    %88 = vset.pattern.permute.xlu0 0
    %89 = vperm.xlu0 %88, %v51
    %v90 = vpop.permute.xlu0 %89
    %93 = vset.pattern.permute.xlu0 0
    %94 = vperm.xlu0 %93, %v52
    %v95 = vpop.permute.xlu0 %94
    %98 = vset.pattern.permute.xlu0 0
    %99 = vperm.xlu0 %98, %v53
    %v100 = vpop.permute.xlu0 %99
    %103 = vset.pattern.permute.xlu0 0
    %104 = vperm.xlu0 %103, %v54
    %v105 = vpop.permute.xlu0 %104
    %108 = vset.pattern.permute.xlu0 0
    %109 = vperm.xlu0 %108, %v55
    %v110 = vpop.permute.xlu0 %109
    %113 = vset.pattern.permute.xlu0 0
    %114 = vperm.xlu0 %113, %v56
    %v115 = vpop.permute.xlu0 %114
    %118 = vset.pattern.permute.xlu0 0
    %119 = vperm.xlu0 %118, %v57
    %v120 = vpop.permute.xlu0 %119
    %123 = vset.pattern.permute.xlu0 0
    %124 = vperm.xlu0 %123, %v58
    %v125 = vpop.permute.xlu0 %124
    %128 = vset.pattern.permute.xlu0 0
    %129 = vperm.xlu0 %128, %v59
    %v130 = vpop.permute.xlu0 %129
    %133 = vset.pattern.permute.xlu0 0
    %134 = vperm.xlu0 %133, %v60
    %v135 = vpop.permute.xlu0 %134
    %138 = vset.pattern.permute.xlu0 0
    %139 = vperm.xlu0 %138, %v61
    %v140 = vpop.permute.xlu0 %139
    %vm142 = vcmask 48128
    %v144 = vsel %vm142, %v30, 0
    %v147 = vsel %vm142, %v31, 0
    %v150 = vsel %vm142, %v32, 0
    %v153 = vsel %vm142, %v33, 0
    %v156 = vsel %vm142, %v34, 0
    %v159 = vsel %vm142, %v35, 0
    %v162 = vsel %vm142, %v36, 0
    %v165 = vsel %vm142, %v37, 0
    %v168 = vsel %vm142, %v38, 0
    %v171 = vsel %vm142, %v39, 0
    %v174 = vsel %vm142, %v40, 0
    %v177 = vsel %vm142, %v41, 0
    %v180 = vsel %vm142, %v42, 0
    %v183 = vsel %vm142, %v43, 0
    %v186 = vsel %vm142, %v44, 0
    %v189 = vsel %vm142, %v45, 0
    %vm191 = vcmask 1045504
    %v193 = vsel %vm191, %v29, 0
    %195 = vmatpush.msra.mxu0 0.0
    %196 = vmatpush.msra.mxu0 0.0
    %197 = vmatpush.msra.mxu0 0.0
    %198 = vmatpush.msra.mxu0 0.0
    %199 = vmatpush.msra.mxu0 0.0
    %200 = vmatpush.msra.mxu0 0.0
    %201 = vmatpush.msra.mxu0 0.0
    %202 = vmatpush.msra.mxu0 0.0
    %203 = vmatpush.msra.mxu0 0.0
    %204 = vmatpush.msra.mxu0 0.0
    %205 = vmatpush.msra.mxu0 0.0
    %206 = vmatpush.msra.mxu0 0.0
    %207 = vmatpush.msra.mxu0 0.0
    %208 = vmatpush.msra.mxu0 0.0
    %209 = vmatpush.msra.mxu0 0.0
    %210 = vmatpush.msra.mxu0 %v193
    %211 = vmatmul.f32.gmra.mxu0 %v144
    %v212 = vpop.f32.mrf.mxu0
    %v213 = vadd.f32 %v65, %v212
    %214 = vmatmul.f32.gmra.mxu0 %v147
    %v215 = vpop.f32.mrf.mxu0
    %v216 = vadd.f32 %v70, %v215
    %217 = vmatmul.f32.gmra.mxu0 %v150
    %v218 = vpop.f32.mrf.mxu0
    %v219 = vadd.f32 %v75, %v218
    %220 = vmatmul.f32.gmra.mxu0 %v153
    %v221 = vpop.f32.mrf.mxu0
    %v222 = vadd.f32 %v80, %v221
    %223 = vmatmul.f32.gmra.mxu0 %v156
    %v224 = vpop.f32.mrf.mxu0
    %v225 = vadd.f32 %v85, %v224
    %226 = vmatmul.f32.gmra.mxu0 %v159
    %v227 = vpop.f32.mrf.mxu0
    %v228 = vadd.f32 %v90, %v227
    %229 = vmatmul.f32.gmra.mxu0 %v162
    %v230 = vpop.f32.mrf.mxu0
    %v231 = vadd.f32 %v95, %v230
    %232 = vmatmul.f32.gmra.mxu0 %v165
    %v233 = vpop.f32.mrf.mxu0
    %v234 = vadd.f32 %v100, %v233
    %235 = vmatmul.f32.gmra.mxu0 %v168
    %v236 = vpop.f32.mrf.mxu0
    %v237 = vadd.f32 %v105, %v236
    %238 = vmatmul.f32.gmra.mxu0 %v171
    %v239 = vpop.f32.mrf.mxu0
    %v240 = vadd.f32 %v110, %v239
    %241 = vmatmul.f32.gmra.mxu0 %v174
    %v242 = vpop.f32.mrf.mxu0
    %v243 = vadd.f32 %v115, %v242
    %244 = vmatmul.f32.gmra.mxu0 %v177
    %v245 = vpop.f32.mrf.mxu0
    %v246 = vadd.f32 %v120, %v245
    %247 = vmatmul.f32.gmra.mxu0 %v180
    %v248 = vpop.f32.mrf.mxu0
    %v249 = vadd.f32 %v125, %v248
    %250 = vmatmul.f32.gmra.mxu0 %v183
    %v251 = vpop.f32.mrf.mxu0
    %v252 = vadd.f32 %v130, %v251
    %253 = vmatmul.f32.gmra.mxu0 %v186
    %v254 = vpop.f32.mrf.mxu0
    %v255 = vadd.f32 %v135, %v254
    %256 = vmatmul.f32.gmra.mxu0 %v189
    %v257 = vpop.f32.mrf.mxu0
    %v258 = vadd.f32 %v140, %v257
    %259 = vdwg.mxu0
    %v260 = vmax.f32 %v213, 0.0
    %v261 = vmax.f32 %v216, 0.0
    %v262 = vmax.f32 %v219, 0.0
    %v263 = vmax.f32 %v222, 0.0
    %v264 = vmax.f32 %v225, 0.0
    %v265 = vmax.f32 %v228, 0.0
    %v266 = vmax.f32 %v231, 0.0
    %v267 = vmax.f32 %v234, 0.0
    %v268 = vmax.f32 %v237, 0.0
    %v269 = vmax.f32 %v240, 0.0
    %v270 = vmax.f32 %v243, 0.0
    %v271 = vmax.f32 %v246, 0.0
    %v272 = vmax.f32 %v249, 0.0
    %v273 = vmax.f32 %v252, 0.0
    %v274 = vmax.f32 %v255, 0.0
    %v275 = vmax.f32 %v258, 0.0
    %v276 = vld [vmem:[%s3] sm:$0xff]
    %v277 = vld [vmem:[%s3 + $0x8] sm:$0xff]
    %v278 = vld [vmem:[%s3 + $0x10] sm:$0xf]
    %v279 = vld [vmem:[%s4] sm:$0xff]
    %v280 = vld [vmem:[%s4 + $0x8] sm:$0xff]
    %v281 = vld [vmem:[%s4 + $0x10] sm:$0xf]
    %283 = vset.pattern.permute.xlu0 0
    %284 = vperm.xlu0 %283, %v279
    %v285 = vpop.permute.xlu0 %284
    %288 = vset.pattern.permute.xlu0 0
    %289 = vperm.xlu0 %288, %v280
    %v290 = vpop.permute.xlu0 %289
    %293 = vset.pattern.permute.xlu0 0
    %294 = vperm.xlu0 %293, %v281
    %v295 = vpop.permute.xlu0 %294
    %297 = vmatpush.msra.mxu0 %v275
    %298 = vmatpush.msra.mxu0 %v274
    %299 = vmatpush.msra.mxu0 %v273
    %300 = vmatpush.msra.mxu0 %v272
    %301 = vmatpush.msra.mxu0 %v271
    %302 = vmatpush.msra.mxu0 %v270
    %303 = vmatpush.msra.mxu0 %v269
    %304 = vmatpush.msra.mxu0 %v268
    %305 = vmatpush.msra.mxu0 %v267
    %306 = vmatpush.msra.mxu0 %v266
    %307 = vmatpush.msra.mxu0 %v265
    %308 = vmatpush.msra.mxu0 %v264
    %309 = vmatpush.msra.mxu0 %v263
    %310 = vmatpush.msra.mxu0 %v262
    %311 = vmatpush.msra.mxu0 %v261
    %312 = vmatpush.msra.mxu0 %v260
    %313 = vmatmul.f32.gmra.mxu0 %v276
    %v314 = vpop.f32.mrf.mxu0
    %v315 = vadd.f32 %v285, %v314
    %316 = vmatmul.f32.gmra.mxu0 %v277
    %v317 = vpop.f32.mrf.mxu0
    %v318 = vadd.f32 %v290, %v317
    %319 = vmatmul.f32.gmra.mxu0 %v278
    %v320 = vpop.f32.mrf.mxu0
    %v321 = vadd.f32 %v295, %v320
    %322 = vdwg.mxu0
    %v323 = vmax.f32 %v315, 0.0
    %v324 = vmax.f32 %v318, 0.0
    %v325 = vld [vmem:[%s5] sm:$0x1]
    %v326 = vld [vmem:[#allocation2] sm:$0x1]
    %328 = vset.pattern.permute.xlu0 0
    %329 = vperm.xlu0 %328, %v326
    %v330 = vpop.permute.xlu0 %329
    %v332 = vperm.slane %v330, 0
    %vm333 = vcmask 130048
    %v335 = vsel %vm333, %v325, 0
    %337 = vmatpush.msra.mxu0 0.0
    %338 = vmatpush.msra.mxu0 0.0
    %339 = vmatpush.msra.mxu0 0.0
    %340 = vmatpush.msra.mxu0 0.0
    %341 = vmatpush.msra.mxu0 0.0
    %342 = vmatpush.msra.mxu0 0.0
    %343 = vmatpush.msra.mxu0 0.0
    %344 = vmatpush.msra.mxu0 0.0
    %345 = vmatpush.msra.mxu0 0.0
    %346 = vmatpush.msra.mxu0 0.0
    %347 = vmatpush.msra.mxu0 0.0
    %348 = vmatpush.msra.mxu0 0.0
    %349 = vmatpush.msra.mxu0 0.0
    %350 = vmatpush.msra.mxu0 0.0
    %351 = vmatpush.msra.mxu0 %v324
    %352 = vmatpush.msra.mxu0 %v323
    %353 = vmatmul.f32.gmra.mxu0 %v335
    %v354 = vpop.f32.mrf.mxu0
    %v355 = vadd.f32 %v332, %v354
    %356 = vdwg.mxu0
    %357 = vst [vmem:[#allocation3] sm:$0xf] %v321
    %358 = vst [vmem:[#allocation3 + $0x4] sm:$0x1] %v355
    %359 = vst [vmem:[#allocation3 + $0x5] sm:$0x7] 0.0
    // Predicated region
    $region30: #{tpu_custom_call.1} parent=1 // pred_check
      _
    $region31: #{tpu_custom_call.1} parent=1 // pred_check_branch
      %361 = sbr.rel (0) target = $region33
    $region32: #{tpu_custom_call.1} parent=1 // pred_region
      %363 = vsyncadd [#allocation4], 0
      %s365 = sshll.u32 [#allocation3], 4
      %s366 = int_to_ptr.vmem [resolvable:$true] %s365
      %s367 = sshll.u32 %s7, 4
      %s368 = int_to_ptr.hbm [resolvable:$true] %s367
      %370 = dma.vmem_to_hbm [thread:$0]  %s366, 128, %s368, [#allocation4]
    $region33: #{tpu_custom_call.1} parent=1 // pred_fallthru
      _
    // Predicated region
    $region34: #{tpu_custom_call.1} parent=1 // pred_check
      _
    $region35: #{tpu_custom_call.1} parent=1 // pred_check_branch
      %372 = sbr.rel (0) target = $region37
    $region36: #{tpu_custom_call.1} parent=1 // pred_region
      %374 = dma.done [#allocation4], 128
    $region37: #{tpu_custom_call.1} parent=1 // pred_fallthru
      _
    %375 = vsyncpa [#allocation4], 1

</llo_original>
